<compile_context>
chip_gen: v5e
topology: v5e:2x2
jax: 0.10.0
libtpu: 0.0.40
codegen_flags: <defaults>
</compile_context>

<pallas_src>
import functools

import jax
import jax.numpy as jnp
from jax.experimental import pallas as pl
from jax.experimental.pallas import tpu as pltpu


def _round_up(x, m):
    return ((x + m - 1) // m) * m


def _dqn_kernel(x_ref,
                w1_ref, w2_ref, w3_ref, w4_ref, w5_ref, w6_ref,
                b_ref, o_ref, *, num_actions):
    """Fused 6-layer MLP forward on one batch tile (weights stay resident)."""
    w_refs = (w1_ref, w2_ref, w3_ref, w4_ref, w5_ref, w6_ref)
    h = x_ref[...]                                     # bf16, sublane-aligned K
    n_layers = len(w_refs)
    for i, w_ref in enumerate(w_refs):
        out_w = w_ref.shape[1]                         # static, multiple of 128
        y = jnp.dot(h, w_ref[...], preferred_element_type=jnp.float32)
        y = y + b_ref[i:i + 1, :out_w]                 # (1, out_w) f32 bias
        if i < n_layers - 1:
            h = jnp.maximum(y, 0.0).astype(jnp.bfloat16)   # ReLU f32 -> bf16 feed
        else:
            # Narrow store: only the real num_actions columns go back to HBM.
            o_ref[...] = y[:, :num_actions]


def init_dqn_params(key, in_features=5, num_actions=8):
    """Deterministic PyTorch-style init. W stored (in, out) f32, b stored (out,) f32."""
    dims = [in_features, 64, 128, 256, 128, 64, num_actions]
    params = []
    for i in range(len(dims) - 1):
        fan_in, fan_out = dims[i], dims[i + 1]
        key, kw, kb = jax.random.split(key, 3)
        bound = 1.0 / jnp.sqrt(jnp.float32(fan_in))
        w = jax.random.uniform(kw, (fan_in, fan_out), jnp.float32, -bound, bound)
        b = jax.random.uniform(kb, (fan_out,), jnp.float32, -bound, bound)
        params.append((w, b))
    return params


def prepare_params(params):
    """Pad W1 rows to a multiple of 8 and layer widths to multiples of 128,
    cast W -> bf16, and pack all biases into one (8, 256) f32 slab.

    Zero-padding is semantics-preserving: padded output columns have zero
    weight and zero bias, ReLU keeps them zero, and the next layer's padded
    input rows are zero, so they contribute nothing.  (Keep padded bias
    entries zero if this function is ever changed.)
    """
    in_features = params[0][0].shape[0]
    out_dims = [w.shape[1] for w, _ in params]
    out_pads = [_round_up(o, 128) for o in out_dims]
    in_pads = [_round_up(in_features, 8)] + out_pads[:-1]

    padded_ws = []
    for (w, _), in_p, out_p in zip(params, in_pads, out_pads):
        w_p = jnp.zeros((in_p, out_p), jnp.bfloat16)
        w_p = w_p.at[:w.shape[0], :w.shape[1]].set(w.astype(jnp.bfloat16))
        padded_ws.append(w_p)

    n_layers = len(params)
    slab_w = max(out_pads)
    bias_slab = jnp.zeros((_round_up(n_layers, 8), slab_w), jnp.float32)
    for i, (_, b) in enumerate(params):
        b_flat = jnp.reshape(b, (-1,)).astype(jnp.float32)
        bias_slab = bias_slab.at[i, :b_flat.shape[0]].set(b_flat)

    return tuple(padded_ws), bias_slab


def _choose_tile(batch, max_tile=512, min_tiles=2):
    """Pick (tb, b_pad, n_tiles): minimize batch padding, keep >= min_tiles grid
    steps (so the 'parallel' axis can span v7x's two TensorCores), and cap the
    tile at max_tile rows so per-step overhead amortizes for large batches."""
    n_tiles = max(min_tiles, -(-batch // max_tile))
    tb = _round_up(-(-batch // n_tiles), 8)
    b_pad = tb * n_tiles
    return tb, b_pad, n_tiles


@functools.partial(jax.jit, static_argnames=("num_actions",))
def dqn_forward(x, padded_ws, bias_slab, num_actions):
    """x: (batch, in_features) f32. Returns (batch, num_actions) f32."""
    batch, in_features = x.shape
    in_pad = padded_ws[0].shape[0]

    tb, b_pad, n_tiles = _choose_tile(batch)

    # Pre-cast to bf16 and pad both batch rows and the feature axis (5 -> 8).
    x_bf = jnp.pad(x.astype(jnp.bfloat16),
                   ((0, b_pad - batch), (0, in_pad - in_features)))

    grid = (n_tiles,)
    x_spec = pl.BlockSpec((tb, in_pad), lambda i: (i, 0))
    w_specs = [pl.BlockSpec(w.shape, lambda i: (0, 0)) for w in padded_ws]
    b_spec = pl.BlockSpec(bias_slab.shape, lambda i: (0, 0))
    # Full-extent last dim (num_actions) is legal even though < 128.
    o_spec = pl.BlockSpec((tb, num_actions), lambda i: (i, 0))

    flops = 2 * b_pad * sum(w.shape[0] * w.shape[1] for w in padded_ws)
    bytes_accessed = (x_bf.size * x_bf.dtype.itemsize
                      + sum(w.size * w.dtype.itemsize for w in padded_ws)
                      + bias_slab.size * bias_slab.dtype.itemsize
                      + b_pad * num_actions * 4)

    out = pl.pallas_call(
        functools.partial(_dqn_kernel, num_actions=num_actions),
        out_shape=jax.ShapeDtypeStruct((b_pad, num_actions), jnp.float32),
        grid=grid,
        in_specs=[x_spec] + w_specs + [b_spec],
        out_specs=o_spec,
        compiler_params=pltpu.CompilerParams(
            dimension_semantics=("parallel",)),
        cost_estimate=pl.CostEstimate(
            flops=flops, transcendentals=0, bytes_accessed=bytes_accessed),
    )(x_bf, *padded_ws, bias_slab)

    # Padded batch rows hold bias-propagated garbage; slice them off.
    return out[:batch]


def dqn_reference(x, padded_ws, bias_slab, num_actions):
    """Plain-JAX reference using the same bf16 weights / f32 accumulation."""
    in_features = x.shape[1]
    in_pad = padded_ws[0].shape[0]
    h = jnp.pad(x, ((0, 0), (0, in_pad - in_features))).astype(jnp.bfloat16)
    n = len(padded_ws)
    for i, w in enumerate(padded_ws):
        out_w = w.shape[1]
        y = jnp.dot(h, w, preferred_element_type=jnp.float32)
        y = y + bias_slab[i:i + 1, :out_w]
        h = jnp.maximum(y, 0.0).astype(jnp.bfloat16) if i < n - 1 else y
    return h[:, :num_actions]


if __name__ == "__main__":
    key = jax.random.PRNGKey(0)
    k_params, k_x1, k_x2 = jax.random.split(key, 3)

    in_features = 5
    num_actions = 8

    raw_params = init_dqn_params(k_params, in_features, num_actions)
    padded_ws, bias_slab = prepare_params(raw_params)

    # Small batch (tb=8, grid=(2,)).
    x_small = jax.random.normal(k_x1, (8, in_features), jnp.float32)
    out_small = jax.block_until_ready(
        dqn_forward(x_small, padded_ws, bias_slab, num_actions=num_actions))
    ref_small = dqn_reference(x_small, padded_ws, bias_slab, num_actions)
    assert out_small.shape == (8, num_actions)
    assert jnp.allclose(out_small, ref_small, atol=1e-2, rtol=1e-2), "mismatch (batch=8)"

    # Larger batch exercising minimal-padding tiling (tb=152, b_pad=304, grid=(2,)).
    x_big = jax.random.normal(k_x2, (300, in_features), jnp.float32)
    out_big = jax.block_until_ready(
        dqn_forward(x_big, padded_ws, bias_slab, num_actions=num_actions))
    ref_big = dqn_reference(x_big, padded_ws, bias_slab, num_actions)
    assert out_big.shape == (300, num_actions)
    assert jnp.allclose(out_big, ref_big, atol=1e-2, rtol=1e-2), "mismatch (batch=300)"

    print("KERNEL_OK")
</pallas_src>

<mosaic_0001>
module attributes {stable_mosaic.version = 11 : i64} {
  func.func @_dqn_kernel(%arg0: i32, %arg1: memref<8x8xbf16, #tpu.memory_space<vmem>>, %arg2: memref<8x128xbf16, #tpu.memory_space<vmem>>, %arg3: memref<128x128xbf16, #tpu.memory_space<vmem>>, %arg4: memref<128x256xbf16, #tpu.memory_space<vmem>>, %arg5: memref<256x128xbf16, #tpu.memory_space<vmem>>, %arg6: memref<128x128xbf16, #tpu.memory_space<vmem>>, %arg7: memref<128x128xbf16, #tpu.memory_space<vmem>>, %arg8: memref<8x256xf32, #tpu.memory_space<vmem>>, %arg9: memref<8x8xf32, #tpu.memory_space<vmem>>) attributes {dimension_semantics = [#tpu.dimension_semantics<parallel>], iteration_bounds = array<i64: 2>, scalar_prefetch = 0 : i64, scratch_operands = 0 : i64, tpu.core_type = #tpu.core_type<tc>, window_params = [{transform_indices = @transform_0, window_bounds = array<i64: 8, 8>}, {pipeline_mode = #tpu.pipeline_mode<synchronous>, transform_indices = @transform_1, window_bounds = array<i64: 8, 128>}, {pipeline_mode = #tpu.pipeline_mode<synchronous>, transform_indices = @transform_2, window_bounds = array<i64: 128, 128>}, {pipeline_mode = #tpu.pipeline_mode<synchronous>, transform_indices = @transform_3, window_bounds = array<i64: 128, 256>}, {pipeline_mode = #tpu.pipeline_mode<synchronous>, transform_indices = @transform_4, window_bounds = array<i64: 256, 128>}, {pipeline_mode = #tpu.pipeline_mode<synchronous>, transform_indices = @transform_5, window_bounds = array<i64: 128, 128>}, {pipeline_mode = #tpu.pipeline_mode<synchronous>, transform_indices = @transform_6, window_bounds = array<i64: 128, 128>}, {pipeline_mode = #tpu.pipeline_mode<synchronous>, transform_indices = @transform_7, window_bounds = array<i64: 8, 256>}, {transform_indices = @transform_8, window_bounds = array<i64: 8, 8>}]} {
    %c0 = arith.constant 0 : index
    %c0_0 = arith.constant 0 : index
    %0 = vector.load %arg1[%c0, %c0_0] : memref<8x8xbf16, #tpu.memory_space<vmem>>, vector<8x8xbf16>
    %c0_1 = arith.constant 0 : index
    %c0_2 = arith.constant 0 : index
    %1 = vector.load %arg2[%c0_1, %c0_2] : memref<8x128xbf16, #tpu.memory_space<vmem>>, vector<8x128xbf16>
    %cst = arith.constant dense<0.000000e+00> : vector<8x128xf32>
    %2 = tpu.matmul %0, %1, %cst {dimension_numbers = #tpu.dot_dimension_numbers<[1], [0], [0], [1], [0, 0, 1, 1], [], []>} : vector<8x8xbf16>, vector<8x128xbf16>, vector<8x128xf32> -> vector<8x128xf32>
    %c0_3 = arith.constant 0 : index
    %c0_4 = arith.constant 0 : index
    %3 = vector.load %arg8[%c0_3, %c0_4] : memref<8x256xf32, #tpu.memory_space<vmem>>, vector<1x128xf32>
    %4 = vector.broadcast %3 : vector<1x128xf32> to vector<8x128xf32>
    %5 = arith.addf %2, %4 : vector<8x128xf32>
    %cst_5 = arith.constant 0.000000e+00 : f32
    %6 = vector.broadcast %cst_5 : f32 to vector<8x128xf32>
    %7 = arith.maximumf %5, %6 : vector<8x128xf32>
    %8 = arith.truncf %7 : vector<8x128xf32> to vector<8x128xbf16>
    %c0_6 = arith.constant 0 : index
    %c0_7 = arith.constant 0 : index
    %9 = vector.load %arg3[%c0_6, %c0_7] : memref<128x128xbf16, #tpu.memory_space<vmem>>, vector<128x128xbf16>
    %cst_8 = arith.constant dense<0.000000e+00> : vector<8x128xf32>
    %10 = tpu.matmul %8, %9, %cst_8 {dimension_numbers = #tpu.dot_dimension_numbers<[1], [0], [0], [1], [0, 0, 1, 1], [], []>} : vector<8x128xbf16>, vector<128x128xbf16>, vector<8x128xf32> -> vector<8x128xf32>
    %c1 = arith.constant 1 : index
    %c0_9 = arith.constant 0 : index
    %11 = vector.load %arg8[%c1, %c0_9] : memref<8x256xf32, #tpu.memory_space<vmem>>, vector<1x128xf32>
    %12 = vector.broadcast %11 : vector<1x128xf32> to vector<8x128xf32>
    %13 = arith.addf %10, %12 : vector<8x128xf32>
    %cst_10 = arith.constant 0.000000e+00 : f32
    %14 = vector.broadcast %cst_10 : f32 to vector<8x128xf32>
    %15 = arith.maximumf %13, %14 : vector<8x128xf32>
    %16 = arith.truncf %15 : vector<8x128xf32> to vector<8x128xbf16>
    %c0_11 = arith.constant 0 : index
    %c0_12 = arith.constant 0 : index
    %17 = vector.load %arg4[%c0_11, %c0_12] : memref<128x256xbf16, #tpu.memory_space<vmem>>, vector<128x256xbf16>
    %cst_13 = arith.constant dense<0.000000e+00> : vector<8x256xf32>
    %18 = tpu.matmul %16, %17, %cst_13 {dimension_numbers = #tpu.dot_dimension_numbers<[1], [0], [0], [1], [0, 0, 1, 1], [], []>} : vector<8x128xbf16>, vector<128x256xbf16>, vector<8x256xf32> -> vector<8x256xf32>
    %c2 = arith.constant 2 : index
    %c0_14 = arith.constant 0 : index
    %19 = vector.load %arg8[%c2, %c0_14] : memref<8x256xf32, #tpu.memory_space<vmem>>, vector<1x256xf32>
    %20 = vector.broadcast %19 : vector<1x256xf32> to vector<8x256xf32>
    %21 = arith.addf %18, %20 : vector<8x256xf32>
    %cst_15 = arith.constant 0.000000e+00 : f32
    %22 = vector.broadcast %cst_15 : f32 to vector<8x256xf32>
    %23 = arith.maximumf %21, %22 : vector<8x256xf32>
    %24 = arith.truncf %23 : vector<8x256xf32> to vector<8x256xbf16>
    %c0_16 = arith.constant 0 : index
    %c0_17 = arith.constant 0 : index
    %25 = vector.load %arg5[%c0_16, %c0_17] : memref<256x128xbf16, #tpu.memory_space<vmem>>, vector<256x128xbf16>
    %cst_18 = arith.constant dense<0.000000e+00> : vector<8x128xf32>
    %26 = tpu.matmul %24, %25, %cst_18 {dimension_numbers = #tpu.dot_dimension_numbers<[1], [0], [0], [1], [0, 0, 1, 1], [], []>} : vector<8x256xbf16>, vector<256x128xbf16>, vector<8x128xf32> -> vector<8x128xf32>
    %c3 = arith.constant 3 : index
    %c0_19 = arith.constant 0 : index
    %27 = vector.load %arg8[%c3, %c0_19] : memref<8x256xf32, #tpu.memory_space<vmem>>, vector<1x128xf32>
    %28 = vector.broadcast %27 : vector<1x128xf32> to vector<8x128xf32>
    %29 = arith.addf %26, %28 : vector<8x128xf32>
    %cst_20 = arith.constant 0.000000e+00 : f32
    %30 = vector.broadcast %cst_20 : f32 to vector<8x128xf32>
    %31 = arith.maximumf %29, %30 : vector<8x128xf32>
    %32 = arith.truncf %31 : vector<8x128xf32> to vector<8x128xbf16>
    %c0_21 = arith.constant 0 : index
    %c0_22 = arith.constant 0 : index
    %33 = vector.load %arg6[%c0_21, %c0_22] : memref<128x128xbf16, #tpu.memory_space<vmem>>, vector<128x128xbf16>
    %cst_23 = arith.constant dense<0.000000e+00> : vector<8x128xf32>
    %34 = tpu.matmul %32, %33, %cst_23 {dimension_numbers = #tpu.dot_dimension_numbers<[1], [0], [0], [1], [0, 0, 1, 1], [], []>} : vector<8x128xbf16>, vector<128x128xbf16>, vector<8x128xf32> -> vector<8x128xf32>
    %c4 = arith.constant 4 : index
    %c0_24 = arith.constant 0 : index
    %35 = vector.load %arg8[%c4, %c0_24] : memref<8x256xf32, #tpu.memory_space<vmem>>, vector<1x128xf32>
    %36 = vector.broadcast %35 : vector<1x128xf32> to vector<8x128xf32>
    %37 = arith.addf %34, %36 : vector<8x128xf32>
    %cst_25 = arith.constant 0.000000e+00 : f32
    %38 = vector.broadcast %cst_25 : f32 to vector<8x128xf32>
    %39 = arith.maximumf %37, %38 : vector<8x128xf32>
    %40 = arith.truncf %39 : vector<8x128xf32> to vector<8x128xbf16>
    %c0_26 = arith.constant 0 : index
    %c0_27 = arith.constant 0 : index
    %41 = vector.load %arg7[%c0_26, %c0_27] : memref<128x128xbf16, #tpu.memory_space<vmem>>, vector<128x128xbf16>
    %cst_28 = arith.constant dense<0.000000e+00> : vector<8x128xf32>
    %42 = tpu.matmul %40, %41, %cst_28 {dimension_numbers = #tpu.dot_dimension_numbers<[1], [0], [0], [1], [0, 0, 1, 1], [], []>} : vector<8x128xbf16>, vector<128x128xbf16>, vector<8x128xf32> -> vector<8x128xf32>
    %c5 = arith.constant 5 : index
    %c0_29 = arith.constant 0 : index
    %43 = vector.load %arg8[%c5, %c0_29] : memref<8x256xf32, #tpu.memory_space<vmem>>, vector<1x128xf32>
    %44 = vector.broadcast %43 : vector<1x128xf32> to vector<8x128xf32>
    %45 = arith.addf %42, %44 : vector<8x128xf32>
    %46 = vector.extract_strided_slice %45 {offsets = [0, 0], sizes = [8, 8], strides = [1, 1]} : vector<8x128xf32> to vector<8x8xf32>
    %c0_30 = arith.constant 0 : index
    %c0_31 = arith.constant 0 : index
    %47 = vector.load %arg9[%c0_30, %c0_31] : memref<8x8xf32, #tpu.memory_space<vmem>>, vector<8x8xf32>
    tpu.vector_store %arg9[%c0_30, %c0_31], %46 {strides = array<i32>} : memref<8x8xf32, #tpu.memory_space<vmem>>, vector<8x8xf32>,
    return
  }
  func.func @transform_0(%arg0: i32) -> (i32, i32) {
    %c0_i32 = arith.constant 0 : i32
    %c0_i32_0 = arith.constant 0 : i32
    return %arg0, %c0_i32 : i32, i32
  }
  func.func @transform_1(%arg0: i32) -> (i32, i32) {
    %c0_i32 = arith.constant 0 : i32
    %c0_i32_0 = arith.constant 0 : i32
    %c0_i32_1 = arith.constant 0 : i32
    return %c0_i32, %c0_i32_0 : i32, i32
  }
  func.func @transform_2(%arg0: i32) -> (i32, i32) {
    %c0_i32 = arith.constant 0 : i32
    %c0_i32_0 = arith.constant 0 : i32
    %c0_i32_1 = arith.constant 0 : i32
    return %c0_i32, %c0_i32_0 : i32, i32
  }
  func.func @transform_3(%arg0: i32) -> (i32, i32) {
    %c0_i32 = arith.constant 0 : i32
    %c0_i32_0 = arith.constant 0 : i32
    %c0_i32_1 = arith.constant 0 : i32
    return %c0_i32, %c0_i32_0 : i32, i32
  }
  func.func @transform_4(%arg0: i32) -> (i32, i32) {
    %c0_i32 = arith.constant 0 : i32
    %c0_i32_0 = arith.constant 0 : i32
    %c0_i32_1 = arith.constant 0 : i32
    return %c0_i32, %c0_i32_0 : i32, i32
  }
  func.func @transform_5(%arg0: i32) -> (i32, i32) {
    %c0_i32 = arith.constant 0 : i32
    %c0_i32_0 = arith.constant 0 : i32
    %c0_i32_1 = arith.constant 0 : i32
    return %c0_i32, %c0_i32_0 : i32, i32
  }
  func.func @transform_6(%arg0: i32) -> (i32, i32) {
    %c0_i32 = arith.constant 0 : i32
    %c0_i32_0 = arith.constant 0 : i32
    %c0_i32_1 = arith.constant 0 : i32
    return %c0_i32, %c0_i32_0 : i32, i32
  }
  func.func @transform_7(%arg0: i32) -> (i32, i32) {
    %c0_i32 = arith.constant 0 : i32
    %c0_i32_0 = arith.constant 0 : i32
    %c0_i32_1 = arith.constant 0 : i32
    return %c0_i32, %c0_i32_0 : i32, i32
  }
  func.func @transform_8(%arg0: i32) -> (i32, i32) {
    %c0_i32 = arith.constant 0 : i32
    %c0_i32_0 = arith.constant 0 : i32
    return %arg0, %c0_i32 : i32, i32
  }
}

</mosaic_0001>

<llo_original>
// kernel: dqn_forward.1
$region0: #{dqn_forward.1}
  #allocation0 [shape = 'u32[]', space=smem, size = 0x4, offset = 0x4, fixed_abs, tag = 'smem constant byte address 0x4 - core index']
  #allocation1 [shape = 'u32[72,128]{1,0:T(1,128)}', space=vmem, size = 0x9000, scoped, tag = 'internal scratch']
  %s0 = inlined_call_operand.vmem [shape: bf16[16,8], index: 0, kind: input, shape index: {}]
  %s1 = inlined_call_operand.vmem [shape: bf16[8,128], index: 1, kind: input, shape index: {}]
  %s2 = inlined_call_operand.hbm [shape: bf16[128,128], index: 2, kind: input, shape index: {}]
  %s3 = inlined_call_operand.hbm [shape: bf16[128,256], index: 3, kind: input, shape index: {}]
  %s4 = inlined_call_operand.hbm [shape: bf16[256,128], index: 4, kind: input, shape index: {}]
  %s5 = inlined_call_operand.hbm [shape: bf16[128,128], index: 5, kind: input, shape index: {}]
  %s6 = inlined_call_operand.hbm [shape: bf16[128,128], index: 6, kind: input, shape index: {}]
  %s7 = inlined_call_operand.vmem [shape: f32[8,256], index: 7, kind: input, shape index: {}]
  %s8 = inlined_call_operand.vmem [shape: f32[16,8], index: 8, kind: output, shape index: {}]
  %s9 = sld [smem:[#allocation0]]
  $region85: #{dqn_forward.1} parent=0
    _
  %s11 = ssub.s32 1, %s9
  %s12 = scalar_select 0, %s11, %s9
  $region1: #{dqn_forward.1} parent=0
    #allocation2 [shape = 'u8[32768]{0}', space=vmem, size = 0x8000, scoped, tag = 'input window, operand 2, single buffered']
    #allocation3 [shape = 's32[2]{0}', space=sflag, size = 0x8, scoped, tag = 'scoped memory for dqn_forward.1']
    #allocation4 [shape = 'u8[65536]{0}', space=vmem, size = 0x10000, scoped, tag = 'input window, operand 3, single buffered']
    #allocation5 [shape = 's32[1]{0}', space=sflag, size = 0x4, scoped, tag = 'scoped memory for dqn_forward.1']
    #allocation6 [shape = 'u8[65536]{0}', space=vmem, size = 0x10000, scoped, tag = 'input window, operand 4, single buffered']
    #allocation7 [shape = 'u8[32768]{0}', space=vmem, size = 0x8000, scoped, tag = 'input window, operand 5, single buffered']
    #allocation8 [shape = 's32[1]{0}', space=sflag, size = 0x4, scoped, tag = 'scoped memory for dqn_forward.1']
    #allocation9 [shape = 'u8[32768]{0}', space=vmem, size = 0x8000, scoped, tag = 'input window, operand 6, single buffered']
    %13 = vsyncpa [#allocation3], 0
    %14 = vsyncpa [#allocation5], 0
    %15 = vsyncpa [#allocation8], 0
    loop: start=0, step=1, limit=4
    $region2: #{dqn_forward.1} parent=1 // loop_pre_header
      _
    $region3: #{dqn_forward.1} parent=1 // loop_header
      %s17 = sphi 0, %s21
      %p18 = scmp.ge.s32.totalorder %s17, 4
      %s27 = sphi 0, %s29
      %s30 = sphi 0, %s27
      %s31 = sphi 0, %s30
      %s47 = sphi 0, %s31
      %s51 = sphi 0, %s51
      %s53 = sphi 0, %s51
      %s54 = sphi 0, %s53
      %s68 = sphi 0, %s54
      %s72 = sphi 0, %s72
      %s74 = sphi 0, %s72
      %s75 = sphi 0, %s74
      %s89 = sphi 0, %s75
      %s93 = sphi 0, %s93
      %s95 = sphi 0, %s93
      %s96 = sphi 0, %s95
      %s110 = sphi 0, %s96
      %s114 = sphi 0, %s114
      %s116 = sphi 0, %s114
      %s117 = sphi 0, %s116
      %s131 = sphi 0, %s117
      %s135 = sphi 0, %s135
      %s137 = sphi 0, %s135
      %s138 = sphi 0, %s137
      %s152 = sphi 0, %s138
      %s156 = sphi 0, %s156
      %s158 = sphi 0, %s156
      %s159 = sphi 0, %s158
      %s173 = sphi 0, %s159
      %s177 = sphi 0, %s177
      %s179 = sphi 0, %s177
      %s180 = sphi 0, %s179
      %s194 = sphi 0, %s180
      %s200 = sphi 0, %s202
      %s203 = sphi 0, %s200
      %s204 = sphi 0, %s203
      %s220 = sphi 0, %s204
    $region4: #{dqn_forward.1} parent=1 // loop_header_branch
      %20 = sbr.rel (%p18) target = $region8
    $region5: #{dqn_forward.1} parent=1 // loop_body
      %s22 = ssub.s32 %s17, 1
      %s23 = ssub.s32 %s17, 2
      %s24 = sadd.s32 %s17, 1
      %s25 = ssub.s32 %s17, %s24
      %p26 = scmp.eq.s32.totalorder %s25, 0
      %s28 = sadd.s32 %s27, 1
      %s29 = scalar_select %p26, %s27, %s28
      %p32 = pneg %p26
      %p33 = scmp.eq.s32.totalorder %s17, 1
      %p34 = por %p32, %p33
      %p35 = scmp.ne.s32.totalorder %s27, %s30
      %p36 = scmp.eq.s32.totalorder %s17, 0
      %p37 = por %p35, %p36
      %p38 = scmp.ne.s32.totalorder %s27, %s30
      %p39 = scmp.eq.s32.totalorder %s22, 1
      %p40 = por %p38, %p39
      %p41 = scmp.ne.s32.totalorder %s30, %s31
      %p42 = scmp.eq.s32.totalorder %s22, 0
      %p43 = por %p41, %p42
      %p44 = scmp.ne.s32.totalorder %s30, %s31
      %p45 = scmp.eq.s32.totalorder %s23, 1
      %p46 = por %p44, %p45
      %p48 = scmp.ne.s32.totalorder %s31, %s47
      %p49 = scmp.eq.s32.totalorder %s23, 0
      %p50 = por %p48, %p49
      %s52 = sadd.s32 %s51, 1
      %p55 = scmp.eq.s32.totalorder %s17, 1
      %p56 = scmp.ne.s32.totalorder %s51, %s53
      %p57 = scmp.eq.s32.totalorder %s17, 0
      %p58 = por %p56, %p57
      %p59 = scmp.ne.s32.totalorder %s51, %s53
      %p60 = scmp.eq.s32.totalorder %s22, 1
      %p61 = por %p59, %p60
      %p62 = scmp.ne.s32.totalorder %s53, %s54
      %p63 = scmp.eq.s32.totalorder %s22, 0
      %p64 = por %p62, %p63
      %p65 = scmp.ne.s32.totalorder %s53, %s54
      %p66 = scmp.eq.s32.totalorder %s23, 1
      %p67 = por %p65, %p66
      %p69 = scmp.ne.s32.totalorder %s54, %s68
      %p70 = scmp.eq.s32.totalorder %s23, 0
      %p71 = por %p69, %p70
      %s73 = sadd.s32 %s72, 1
      %p76 = scmp.eq.s32.totalorder %s17, 1
      %p77 = scmp.ne.s32.totalorder %s72, %s74
      %p78 = scmp.eq.s32.totalorder %s17, 0
      %p79 = por %p77, %p78
      %p80 = scmp.ne.s32.totalorder %s72, %s74
      %p81 = scmp.eq.s32.totalorder %s22, 1
      %p82 = por %p80, %p81
      %p83 = scmp.ne.s32.totalorder %s74, %s75
      %p84 = scmp.eq.s32.totalorder %s22, 0
      %p85 = por %p83, %p84
      %p86 = scmp.ne.s32.totalorder %s74, %s75
      %p87 = scmp.eq.s32.totalorder %s23, 1
      %p88 = por %p86, %p87
      %p90 = scmp.ne.s32.totalorder %s75, %s89
      %p91 = scmp.eq.s32.totalorder %s23, 0
      %p92 = por %p90, %p91
      %s94 = sadd.s32 %s93, 1
      %p97 = scmp.eq.s32.totalorder %s17, 1
      %p98 = scmp.ne.s32.totalorder %s93, %s95
      %p99 = scmp.eq.s32.totalorder %s17, 0
      %p100 = por %p98, %p99
      %p101 = scmp.ne.s32.totalorder %s93, %s95
      %p102 = scmp.eq.s32.totalorder %s22, 1
      %p103 = por %p101, %p102
      %p104 = scmp.ne.s32.totalorder %s95, %s96
      %p105 = scmp.eq.s32.totalorder %s22, 0
      %p106 = por %p104, %p105
      %p107 = scmp.ne.s32.totalorder %s95, %s96
      %p108 = scmp.eq.s32.totalorder %s23, 1
      %p109 = por %p107, %p108
      %p111 = scmp.ne.s32.totalorder %s96, %s110
      %p112 = scmp.eq.s32.totalorder %s23, 0
      %p113 = por %p111, %p112
      %s115 = sadd.s32 %s114, 1
      %p118 = scmp.eq.s32.totalorder %s17, 1
      %p119 = scmp.ne.s32.totalorder %s114, %s116
      %p120 = scmp.eq.s32.totalorder %s17, 0
      %p121 = por %p119, %p120
      %p122 = scmp.ne.s32.totalorder %s114, %s116
      %p123 = scmp.eq.s32.totalorder %s22, 1
      %p124 = por %p122, %p123
      %p125 = scmp.ne.s32.totalorder %s116, %s117
      %p126 = scmp.eq.s32.totalorder %s22, 0
      %p127 = por %p125, %p126
      %p128 = scmp.ne.s32.totalorder %s116, %s117
      %p129 = scmp.eq.s32.totalorder %s23, 1
      %p130 = por %p128, %p129
      %p132 = scmp.ne.s32.totalorder %s117, %s131
      %p133 = scmp.eq.s32.totalorder %s23, 0
      %p134 = por %p132, %p133
      %s136 = sadd.s32 %s135, 1
      %p139 = scmp.eq.s32.totalorder %s17, 1
      %p140 = scmp.ne.s32.totalorder %s135, %s137
      %p141 = scmp.eq.s32.totalorder %s17, 0
      %p142 = por %p140, %p141
      %p143 = scmp.ne.s32.totalorder %s135, %s137
      %p144 = scmp.eq.s32.totalorder %s22, 1
      %p145 = por %p143, %p144
      %p146 = scmp.ne.s32.totalorder %s137, %s138
      %p147 = scmp.eq.s32.totalorder %s22, 0
      %p148 = por %p146, %p147
      %p149 = scmp.ne.s32.totalorder %s137, %s138
      %p150 = scmp.eq.s32.totalorder %s23, 1
      %p151 = por %p149, %p150
      %p153 = scmp.ne.s32.totalorder %s138, %s152
      %p154 = scmp.eq.s32.totalorder %s23, 0
      %p155 = por %p153, %p154
      %s157 = sadd.s32 %s156, 1
      %p160 = scmp.eq.s32.totalorder %s17, 1
      %p161 = scmp.ne.s32.totalorder %s156, %s158
      %p162 = scmp.eq.s32.totalorder %s17, 0
      %p163 = por %p161, %p162
      %p164 = scmp.ne.s32.totalorder %s156, %s158
      %p165 = scmp.eq.s32.totalorder %s22, 1
      %p166 = por %p164, %p165
      %p167 = scmp.ne.s32.totalorder %s158, %s159
      %p168 = scmp.eq.s32.totalorder %s22, 0
      %p169 = por %p167, %p168
      %p170 = scmp.ne.s32.totalorder %s158, %s159
      %p171 = scmp.eq.s32.totalorder %s23, 1
      %p172 = por %p170, %p171
      %p174 = scmp.ne.s32.totalorder %s159, %s173
      %p175 = scmp.eq.s32.totalorder %s23, 0
      %p176 = por %p174, %p175
      %s178 = sadd.s32 %s177, 1
      %p181 = scmp.eq.s32.totalorder %s17, 1
      %p182 = scmp.ne.s32.totalorder %s177, %s179
      %p183 = scmp.eq.s32.totalorder %s17, 0
      %p184 = por %p182, %p183
      %p185 = scmp.ne.s32.totalorder %s177, %s179
      %p186 = scmp.eq.s32.totalorder %s22, 1
      %p187 = por %p185, %p186
      %p188 = scmp.ne.s32.totalorder %s179, %s180
      %p189 = scmp.eq.s32.totalorder %s22, 0
      %p190 = por %p188, %p189
      %p191 = scmp.ne.s32.totalorder %s179, %s180
      %p192 = scmp.eq.s32.totalorder %s23, 1
      %p193 = por %p191, %p192
      %p195 = scmp.ne.s32.totalorder %s180, %s194
      %p196 = scmp.eq.s32.totalorder %s23, 0
      %p197 = por %p195, %p196
      %s198 = ssub.s32 %s17, %s24
      %p199 = scmp.eq.s32.totalorder %s198, 0
      %s201 = sadd.s32 %s200, 1
      %s202 = scalar_select %p199, %s200, %s201
      %p205 = pneg %p199
      %p206 = scmp.eq.s32.totalorder %s17, 1
      %p207 = por %p205, %p206
      %p208 = scmp.ne.s32.totalorder %s200, %s203
      %p209 = scmp.eq.s32.totalorder %s17, 0
      %p210 = por %p208, %p209
      %p211 = scmp.ne.s32.totalorder %s200, %s203
      %p212 = scmp.eq.s32.totalorder %s22, 1
      %p213 = por %p211, %p212
      %p214 = scmp.ne.s32.totalorder %s203, %s204
      %p215 = scmp.eq.s32.totalorder %s22, 0
      %p216 = por %p214, %p215
      %p217 = scmp.ne.s32.totalorder %s203, %s204
      %p218 = scmp.eq.s32.totalorder %s23, 1
      %p219 = por %p217, %p218
      %p221 = scmp.ne.s32.totalorder %s204, %s220
      %p222 = scmp.eq.s32.totalorder %s23, 0
      %p223 = por %p221, %p222
      %p224 = scmp.le.s32.totalorder 1, %s17
      %p225 = scmp.lt.s32.totalorder %s17, 3
      %p226 = pnand %p224, %p225
      %p227 = pneg %p226
      // Predicated region
      $region9: #{dqn_forward.1} parent=5 // pred_check
        _
      $region10: #{dqn_forward.1} parent=5 // pred_check_branch
        %229 = sbr.rel (%p226) target = $region12
      $region11: #{dqn_forward.1} parent=5 // pred_region
        %s230 = ssub.s32 %s17, 1
        // Predicated region
        $region13: #{dqn_forward.1} parent=11 // pred_check
          %p231 = pneg %p64
        $region14: #{dqn_forward.1} parent=11 // pred_check_branch
          %233 = sbr.rel (%p231) target = $region16
        $region15: #{dqn_forward.1} parent=11 // pred_region
          _
        $region16: #{dqn_forward.1} parent=11 // pred_fallthru
          _
        // Predicated region
        $region17: #{dqn_forward.1} parent=11 // pred_check
          %p234 = pneg %p85
        $region18: #{dqn_forward.1} parent=11 // pred_check_branch
          %236 = sbr.rel (%p234) target = $region20
        $region19: #{dqn_forward.1} parent=11 // pred_region
          %238 = vsyncadd [#allocation3], 0
          %s239 = sshll.u32 %s2, 4
          %s240 = int_to_ptr.hbm [resolvable:$true] %s239
          %s241 = sshll.u32 [#allocation2], 4
          %s242 = int_to_ptr.vmem [resolvable:$true] %s241
          %247 = dma.hbm_to_vmem [thread:$0]  %s240, 1024, %s242, [#allocation3], 64, 64, 4
        $region20: #{dqn_forward.1} parent=11 // pred_fallthru
          _
        // Predicated region
        $region21: #{dqn_forward.1} parent=11 // pred_check
          %p248 = pneg %p106
        $region22: #{dqn_forward.1} parent=11 // pred_check_branch
          %250 = sbr.rel (%p248) target = $region24
        $region23: #{dqn_forward.1} parent=11 // pred_region
          %252 = vsyncadd [#allocation5], 0
          %s253 = sshll.u32 %s3, 4
          %s254 = int_to_ptr.hbm [resolvable:$true] %s253
          %s255 = sshll.u32 [#allocation4], 4
          %s256 = int_to_ptr.vmem [resolvable:$true] %s255
          %261 = dma.hbm_to_vmem [thread:$0]  %s254, 2048, %s256, [#allocation5], 128, 128, 8
        $region24: #{dqn_forward.1} parent=11 // pred_fallthru
          _
        // Predicated region
        $region25: #{dqn_forward.1} parent=11 // pred_check
          %p262 = pneg %p127
        $region26: #{dqn_forward.1} parent=11 // pred_check_branch
          %264 = sbr.rel (%p262) target = $region28
        $region27: #{dqn_forward.1} parent=11 // pred_region
          %266 = vsyncadd [#allocation5], 0
          %s267 = sshll.u32 %s4, 4
          %s268 = int_to_ptr.hbm [resolvable:$true] %s267
          %s269 = sshll.u32 [#allocation6], 4
          %s270 = int_to_ptr.vmem [resolvable:$true] %s269
          %275 = dma.hbm_to_vmem [thread:$0]  %s268, 2048, %s270, [#allocation5], 64, 64, 4
        $region28: #{dqn_forward.1} parent=11 // pred_fallthru
          _
        // Predicated region
        $region29: #{dqn_forward.1} parent=11 // pred_check
          %p276 = pneg %p148
        $region30: #{dqn_forward.1} parent=11 // pred_check_branch
          %278 = sbr.rel (%p276) target = $region32
        $region31: #{dqn_forward.1} parent=11 // pred_region
          %280 = vsyncadd [#allocation8], 0
          %s281 = sshll.u32 %s5, 4
          %s282 = int_to_ptr.hbm [resolvable:$true] %s281
          %s283 = sshll.u32 [#allocation7], 4
          %s284 = int_to_ptr.vmem [resolvable:$true] %s283
          %289 = dma.hbm_to_vmem [thread:$0]  %s282, 1024, %s284, [#allocation8], 64, 64, 4
        $region32: #{dqn_forward.1} parent=11 // pred_fallthru
          _
        // Predicated region
        $region33: #{dqn_forward.1} parent=11 // pred_check
          %p290 = pneg %p169
        $region34: #{dqn_forward.1} parent=11 // pred_check_branch
          %292 = sbr.rel (%p290) target = $region36
        $region35: #{dqn_forward.1} parent=11 // pred_region
          %294 = vsyncadd [#allocation8], 0
          %s295 = sshll.u32 %s6, 4
          %s296 = int_to_ptr.hbm [resolvable:$true] %s295
          %s297 = sshll.u32 [#allocation9], 4
          %s298 = int_to_ptr.vmem [resolvable:$true] %s297
          %303 = dma.hbm_to_vmem [thread:$0]  %s296, 1024, %s298, [#allocation8], 64, 64, 4
        $region36: #{dqn_forward.1} parent=11 // pred_fallthru
          _
        // Predicated region
        $region37: #{dqn_forward.1} parent=11 // pred_check
          %p304 = pneg %p190
        $region38: #{dqn_forward.1} parent=11 // pred_check_branch
          %306 = sbr.rel (%p304) target = $region40
        $region39: #{dqn_forward.1} parent=11 // pred_region
          _
        $region40: #{dqn_forward.1} parent=11 // pred_fallthru
          _
      $region12: #{dqn_forward.1} parent=5 // pred_fallthru
        _
      %p307 = scmp.lt.s32.totalorder %s17, 2
      // Predicated region
      $region41: #{dqn_forward.1} parent=5 // pred_check
        %p308 = pneg %p307
      $region42: #{dqn_forward.1} parent=5 // pred_check_branch
        %310 = sbr.rel (%p308) target = $region44
      $region43: #{dqn_forward.1} parent=5 // pred_region
        // Predicated region
        $region45: #{dqn_forward.1} parent=43 // pred_check
          %p311 = pneg %p37
        $region46: #{dqn_forward.1} parent=43 // pred_check_branch
          %313 = sbr.rel (%p311) target = $region48
        $region47: #{dqn_forward.1} parent=43 // pred_region
          %p314 = scmp.lt.s32.totalorder %s17, 1
          %s315 = scalar_select %p314, %s17, 1
          %s316 = smul.addr %s315, 4
          %s317 = scalar_lea.vmem %s0, %s316
        $region48: #{dqn_forward.1} parent=43 // pred_fallthru
          _
      $region44: #{dqn_forward.1} parent=5 // pred_fallthru
        _
      %p318 = scmp.le.s32.totalorder 1, %s17
      %p319 = scmp.lt.s32.totalorder %s17, 3
      %p320 = pnand %p318, %p319
      %p321 = pneg %p320
      // Predicated region
      $region49: #{dqn_forward.1} parent=5 // pred_check
        _
      $region50: #{dqn_forward.1} parent=5 // pred_check_branch
        %323 = sbr.rel (%p320) target = $region52
      $region51: #{dqn_forward.1} parent=5 // pred_region
        %s324 = ssub.s32 %s17, 1
        // Predicated region
        $region53: #{dqn_forward.1} parent=51 // pred_check
          %p325 = pneg %p85
        $region54: #{dqn_forward.1} parent=51 // pred_check_branch
          %327 = sbr.rel (%p325) target = $region56
        $region55: #{dqn_forward.1} parent=51 // pred_region
          %329 = dma.done [#allocation3], 1024
        $region56: #{dqn_forward.1} parent=51 // pred_fallthru
          _
        // Predicated region
        $region57: #{dqn_forward.1} parent=51 // pred_check
          %p330 = pneg %p106
        $region58: #{dqn_forward.1} parent=51 // pred_check_branch
          %332 = sbr.rel (%p330) target = $region60
        $region59: #{dqn_forward.1} parent=51 // pred_region
          %334 = dma.done [#allocation5], 2048
        $region60: #{dqn_forward.1} parent=51 // pred_fallthru
          _
        // Predicated region
        $region61: #{dqn_forward.1} parent=51 // pred_check
          %p335 = pneg %p127
        $region62: #{dqn_forward.1} parent=51 // pred_check_branch
          %337 = sbr.rel (%p335) target = $region64
        $region63: #{dqn_forward.1} parent=51 // pred_region
          %339 = dma.done [#allocation5], 2048
        $region64: #{dqn_forward.1} parent=51 // pred_fallthru
          _
        // Predicated region
        $region65: #{dqn_forward.1} parent=51 // pred_check
          %p340 = pneg %p148
        $region66: #{dqn_forward.1} parent=51 // pred_check_branch
          %342 = sbr.rel (%p340) target = $region68
        $region67: #{dqn_forward.1} parent=51 // pred_region
          %344 = dma.done [#allocation8], 1024
        $region68: #{dqn_forward.1} parent=51 // pred_fallthru
          _
        // Predicated region
        $region69: #{dqn_forward.1} parent=51 // pred_check
          %p345 = pneg %p169
        $region70: #{dqn_forward.1} parent=51 // pred_check_branch
          %347 = sbr.rel (%p345) target = $region72
        $region71: #{dqn_forward.1} parent=51 // pred_region
          %349 = dma.done [#allocation8], 1024
        $region72: #{dqn_forward.1} parent=51 // pred_fallthru
          _
        %p350 = scmp.lt.s32.totalorder %s22, 1
        %s351 = scalar_select %p350, %s22, 1
        %s352 = smul.addr %s351, 4
        %s353 = scalar_lea.vmem %s0, %s352
        %p354 = pneg %p43
        %p355 = pneg %p40
        %p356 = pneg %p64
        %p357 = pneg %p61
        %p358 = pneg %p85
        %p359 = pneg %p82
        %p360 = pneg %p106
        %p361 = pneg %p103
        %p362 = pneg %p127
        %p363 = pneg %p124
        %p364 = pneg %p148
        %p365 = pneg %p145
        %p366 = pneg %p169
        %p367 = pneg %p166
        %p368 = pneg %p190
        %p369 = pneg %p187
        %p370 = pneg %p216
        %p371 = pneg %p213
        %p372 = scmp.lt.s32.totalorder %s22, 1
        %s373 = scalar_select %p372, %s22, 1
        %s374 = smul.addr %s373, 8
        %s375 = scalar_lea.vmem %s8, %s374
        %p376 = scmp.lt.s32.totalorder %s22, 1
        %s377 = scalar_select %p376, %s22, 1
        %s378 = smul.addr %s377, 4
        %s379 = scalar_lea.vmem %s0, %s378
        %p380 = scmp.lt.s32.totalorder %s22, 1
        %s381 = scalar_select %p380, %s22, 1
        %s382 = smul.addr %s381, 8
        %s383 = scalar_lea.vmem %s8, %s382
        %v385 = vld [vmem:[%s379] sm:$0xf]
        %v386 = vld [vmem:[%s1] sm:$0xf]
        %v387 = vld [vmem:[%s7] ss:$0 sm:$0xff]
        %vm388 = vcmask 64512
        %v390 = vsel %vm388, %v385, 0
        %vm392 = vcmask 1043456
        %v394 = vsel %vm392, %v386, 0
        %396 = vmatpush.bf16.msra.mxu0 0
        %397 = vmatpush.bf16.msra.mxu0 0
        %398 = vmatpush.bf16.msra.mxu0 0
        %399 = vmatpush.bf16.msra.mxu0 0
        %400 = vmatpush.bf16.msra.mxu0 0
        %401 = vmatpush.bf16.msra.mxu0 0
        %402 = vmatpush.bf16.msra.mxu0 0
        %403 = vmatpush.bf16.msra.mxu0 %v394
        %404 = vmatmul.bf16.gmra.mxu0 %v390
        %v405 = vpop.f32.mrf.mxu0
        %v406 = vadd.f32 %v387, %v405
        %v407 = vpop.f32.mrf.mxu0
        %408 = vdwg.mxu0
        %v409 = vmax.f32 %v406, 0.0
        %v410 = vpack.c.bf16 %v409, %v409
        %v411 = vld [vmem:[#allocation2] sm:$0xf]
        %v412 = vld [vmem:[#allocation2 + $0x4] sm:$0xf]
        %v413 = vld [vmem:[#allocation2 + $0x8] sm:$0xf]
        %v414 = vld [vmem:[#allocation2 + $0xc] sm:$0xf]
        %v415 = vld [vmem:[#allocation2 + $0x10] sm:$0xf]
        %v416 = vld [vmem:[#allocation2 + $0x14] sm:$0xf]
        %v417 = vld [vmem:[#allocation2 + $0x18] sm:$0xf]
        %v418 = vld [vmem:[#allocation2 + $0x1c] sm:$0xf]
        %v419 = vld [vmem:[#allocation2 + $0x20] sm:$0xf]
        %v420 = vld [vmem:[#allocation2 + $0x24] sm:$0xf]
        %v421 = vld [vmem:[#allocation2 + $0x28] sm:$0xf]
        %v422 = vld [vmem:[#allocation2 + $0x2c] sm:$0xf]
        %v423 = vld [vmem:[#allocation2 + $0x30] sm:$0xf]
        %v424 = vld [vmem:[#allocation2 + $0x34] sm:$0xf]
        %v425 = vld [vmem:[#allocation2 + $0x38] sm:$0xf]
        %v426 = vld [vmem:[#allocation2 + $0x3c] sm:$0xf]
        %v427 = vld [vmem:[%s7 + $0x1] ss:$0 sm:$0xff]
        %v444 = vunpack.c.l.b16 %v411
        %v445 = vunpack.c.l.b16 %v412
        %v446 = vunpack.c.l.b16 %v413
        %v447 = vunpack.c.l.b16 %v414
        %v448 = vunpack.c.l.b16 %v415
        %v449 = vunpack.c.l.b16 %v416
        %v450 = vunpack.c.l.b16 %v417
        %v451 = vunpack.c.l.b16 %v418
        %v452 = vunpack.c.l.b16 %v419
        %v453 = vunpack.c.l.b16 %v420
        %v454 = vunpack.c.l.b16 %v421
        %v455 = vunpack.c.l.b16 %v422
        %v456 = vunpack.c.l.b16 %v423
        %v457 = vunpack.c.l.b16 %v424
        %v458 = vunpack.c.l.b16 %v425
        %v459 = vunpack.c.l.b16 %v426
        %v460 = vpack.c.b16 %v445, %v444
        %v461 = vpack.c.b16 %v447, %v446
        %v462 = vpack.c.b16 %v449, %v448
        %v463 = vpack.c.b16 %v451, %v450
        %v464 = vpack.c.b16 %v453, %v452
        %v465 = vpack.c.b16 %v455, %v454
        %v466 = vpack.c.b16 %v457, %v456
        %v467 = vpack.c.b16 %v459, %v458
        %476 = vmatpush.bf16.msra.mxu0 %v467
        %477 = vmatpush.bf16.msra.mxu0 %v466
        %478 = vmatpush.bf16.msra.mxu0 %v465
        %479 = vmatpush.bf16.msra.mxu0 %v464
        %480 = vmatpush.bf16.msra.mxu0 %v463
        %481 = vmatpush.bf16.msra.mxu0 %v462
        %482 = vmatpush.bf16.msra.mxu0 %v461
        %483 = vmatpush.bf16.msra.mxu0 %v460
        %484 = vmatmul.bf16.gmra.mxu0 %v410
        %v485 = vpop.f32.mrf.mxu0
        %v486 = vadd.f32 %v427, %v485
        %v487 = vpop.f32.mrf.mxu0
        %488 = vdwg.mxu0
        %v489 = vmax.f32 %v486, 0.0
        %v490 = vpack.c.bf16 %v489, %v489
        %v491 = vld [vmem:[#allocation4] sm:$0xff]
        %v492 = vld [vmem:[#allocation4 + $0x8] sm:$0xff]
        %v493 = vld [vmem:[#allocation4 + $0x10] sm:$0xff]
        %v494 = vld [vmem:[#allocation4 + $0x18] sm:$0xff]
        %v495 = vld [vmem:[#allocation4 + $0x20] sm:$0xff]
        %v496 = vld [vmem:[#allocation4 + $0x28] sm:$0xff]
        %v497 = vld [vmem:[#allocation4 + $0x30] sm:$0xff]
        %v498 = vld [vmem:[#allocation4 + $0x38] sm:$0xff]
        %v499 = vld [vmem:[#allocation4 + $0x40] sm:$0xff]
        %v500 = vld [vmem:[#allocation4 + $0x48] sm:$0xff]
        %v501 = vld [vmem:[#allocation4 + $0x50] sm:$0xff]
        %v502 = vld [vmem:[#allocation4 + $0x58] sm:$0xff]
        %v503 = vld [vmem:[#allocation4 + $0x60] sm:$0xff]
        %v504 = vld [vmem:[#allocation4 + $0x68] sm:$0xff]
        %v505 = vld [vmem:[#allocation4 + $0x70] sm:$0xff]
        %v506 = vld [vmem:[#allocation4 + $0x78] sm:$0xff]
        %s507 = scalar_lea.vmem %s7, 2
        %v508 = vld [vmem:[%s507] ss:$8 sm:$0x3]
        %v510 = vperm.slane %v508, 0
        %v511 = vperm.slane %v508, 1
        %v530 = vunpack.c.l.b16 %v491
        %v531 = vunpack.c.h.b16 %v491
        %v532 = vunpack.c.l.b16 %v492
        %v533 = vunpack.c.h.b16 %v492
        %v534 = vunpack.c.l.b16 %v493
        %v535 = vunpack.c.h.b16 %v493
        %v536 = vunpack.c.l.b16 %v494
        %v537 = vunpack.c.h.b16 %v494
        %v538 = vunpack.c.l.b16 %v495
        %v539 = vunpack.c.h.b16 %v495
        %v540 = vunpack.c.l.b16 %v496
        %v541 = vunpack.c.h.b16 %v496
        %v542 = vunpack.c.l.b16 %v497
        %v543 = vunpack.c.h.b16 %v497
        %v544 = vunpack.c.l.b16 %v498
        %v545 = vunpack.c.h.b16 %v498
        %v546 = vunpack.c.l.b16 %v499
        %v547 = vunpack.c.h.b16 %v499
        %v548 = vunpack.c.l.b16 %v500
        %v549 = vunpack.c.h.b16 %v500
        %v550 = vunpack.c.l.b16 %v501
        %v551 = vunpack.c.h.b16 %v501
        %v552 = vunpack.c.l.b16 %v502
        %v553 = vunpack.c.h.b16 %v502
        %v554 = vunpack.c.l.b16 %v503
        %v555 = vunpack.c.h.b16 %v503
        %v556 = vunpack.c.l.b16 %v504
        %v557 = vunpack.c.h.b16 %v504
        %v558 = vunpack.c.l.b16 %v505
        %v559 = vunpack.c.h.b16 %v505
        %v560 = vunpack.c.l.b16 %v506
        %v561 = vunpack.c.h.b16 %v506
        %v562 = vpack.c.b16 %v532, %v530
        %v563 = vpack.c.b16 %v533, %v531
        %v564 = vpack.c.b16 %v536, %v534
        %v565 = vpack.c.b16 %v537, %v535
        %v566 = vpack.c.b16 %v540, %v538
        %v567 = vpack.c.b16 %v541, %v539
        %v568 = vpack.c.b16 %v544, %v542
        %v569 = vpack.c.b16 %v545, %v543
        %v570 = vpack.c.b16 %v548, %v546
        %v571 = vpack.c.b16 %v549, %v547
        %v572 = vpack.c.b16 %v552, %v550
        %v573 = vpack.c.b16 %v553, %v551
        %v574 = vpack.c.b16 %v556, %v554
        %v575 = vpack.c.b16 %v557, %v555
        %v576 = vpack.c.b16 %v560, %v558
        %v577 = vpack.c.b16 %v561, %v559
        %594 = vmatpush.bf16.msra.mxu0 %v576
        %595 = vmatpush.bf16.msra.mxu0 %v574
        %596 = vmatpush.bf16.msra.mxu0 %v572
        %597 = vmatpush.bf16.msra.mxu0 %v570
        %598 = vmatpush.bf16.msra.mxu0 %v568
        %599 = vmatpush.bf16.msra.mxu0 %v566
        %600 = vmatpush.bf16.msra.mxu0 %v564
        %601 = vmatpush.bf16.msra.mxu0 %v562
        %602 = vmatmul.bf16.gmra.mxu0 %v490
        %v603 = vpop.f32.mrf.mxu0
        %v604 = vadd.f32 %v510, %v603
        %v605 = vpop.f32.mrf.mxu0
        %606 = vdwg.mxu0
        %607 = vmatpush.bf16.msra.mxu0 %v577
        %608 = vmatpush.bf16.msra.mxu0 %v575
        %609 = vmatpush.bf16.msra.mxu0 %v573
        %610 = vmatpush.bf16.msra.mxu0 %v571
        %611 = vmatpush.bf16.msra.mxu0 %v569
        %612 = vmatpush.bf16.msra.mxu0 %v567
        %613 = vmatpush.bf16.msra.mxu0 %v565
        %614 = vmatpush.bf16.msra.mxu0 %v563
        %615 = vmatmul.bf16.gmra.mxu0 %v490
        %v616 = vpop.f32.mrf.mxu0
        %v617 = vadd.f32 %v511, %v616
        %v618 = vpop.f32.mrf.mxu0
        %619 = vdwg.mxu0
        %v620 = vmax.f32 %v604, 0.0
        %v621 = vmax.f32 %v617, 0.0
        %v622 = vpack.c.bf16 %v620, %v620
        %v623 = vpack.c.bf16 %v621, %v621
        %v624 = vld [vmem:[#allocation6] sm:$0xf]
        %v625 = vld [vmem:[#allocation6 + $0x4] sm:$0xf]
        %v626 = vld [vmem:[#allocation6 + $0x8] sm:$0xf]
        %v627 = vld [vmem:[#allocation6 + $0xc] sm:$0xf]
        %v628 = vld [vmem:[#allocation6 + $0x10] sm:$0xf]
        %v629 = vld [vmem:[#allocation6 + $0x14] sm:$0xf]
        %v630 = vld [vmem:[#allocation6 + $0x18] sm:$0xf]
        %v631 = vld [vmem:[#allocation6 + $0x1c] sm:$0xf]
        %v632 = vld [vmem:[#allocation6 + $0x20] sm:$0xf]
        %v633 = vld [vmem:[#allocation6 + $0x24] sm:$0xf]
        %v634 = vld [vmem:[#allocation6 + $0x28] sm:$0xf]
        %v635 = vld [vmem:[#allocation6 + $0x2c] sm:$0xf]
        %v636 = vld [vmem:[#allocation6 + $0x30] sm:$0xf]
        %v637 = vld [vmem:[#allocation6 + $0x34] sm:$0xf]
        %v638 = vld [vmem:[#allocation6 + $0x38] sm:$0xf]
        %v639 = vld [vmem:[#allocation6 + $0x3c] sm:$0xf]
        %v640 = vld [vmem:[#allocation6 + $0x40] sm:$0xf]
        %v641 = vld [vmem:[#allocation6 + $0x44] sm:$0xf]
        %v642 = vld [vmem:[#allocation6 + $0x48] sm:$0xf]
        %v643 = vld [vmem:[#allocation6 + $0x4c] sm:$0xf]
        %v644 = vld [vmem:[#allocation6 + $0x50] sm:$0xf]
        %v645 = vld [vmem:[#allocation6 + $0x54] sm:$0xf]
        %v646 = vld [vmem:[#allocation6 + $0x58] sm:$0xf]
        %v647 = vld [vmem:[#allocation6 + $0x5c] sm:$0xf]
        %v648 = vld [vmem:[#allocation6 + $0x60] sm:$0xf]
        %v649 = vld [vmem:[#allocation6 + $0x64] sm:$0xf]
        %v650 = vld [vmem:[#allocation6 + $0x68] sm:$0xf]
        %v651 = vld [vmem:[#allocation6 + $0x6c] sm:$0xf]
        %v652 = vld [vmem:[#allocation6 + $0x70] sm:$0xf]
        %v653 = vld [vmem:[#allocation6 + $0x74] sm:$0xf]
        %v654 = vld [vmem:[#allocation6 + $0x78] sm:$0xf]
        %v655 = vld [vmem:[#allocation6 + $0x7c] sm:$0xf]
        %v656 = vld [vmem:[%s7 + $0x3] ss:$0 sm:$0xff]
        %v689 = vunpack.c.l.b16 %v624
        %v690 = vunpack.c.l.b16 %v625
        %v691 = vunpack.c.l.b16 %v626
        %v692 = vunpack.c.l.b16 %v627
        %v693 = vunpack.c.l.b16 %v628
        %v694 = vunpack.c.l.b16 %v629
        %v695 = vunpack.c.l.b16 %v630
        %v696 = vunpack.c.l.b16 %v631
        %v697 = vunpack.c.l.b16 %v632
        %v698 = vunpack.c.l.b16 %v633
        %v699 = vunpack.c.l.b16 %v634
        %v700 = vunpack.c.l.b16 %v635
        %v701 = vunpack.c.l.b16 %v636
        %v702 = vunpack.c.l.b16 %v637
        %v703 = vunpack.c.l.b16 %v638
        %v704 = vunpack.c.l.b16 %v639
        %v705 = vunpack.c.l.b16 %v640
        %v706 = vunpack.c.l.b16 %v641
        %v707 = vunpack.c.l.b16 %v642
        %v708 = vunpack.c.l.b16 %v643
        %v709 = vunpack.c.l.b16 %v644
        %v710 = vunpack.c.l.b16 %v645
        %v711 = vunpack.c.l.b16 %v646
        %v712 = vunpack.c.l.b16 %v647
        %v713 = vunpack.c.l.b16 %v648
        %v714 = vunpack.c.l.b16 %v649
        %v715 = vunpack.c.l.b16 %v650
        %v716 = vunpack.c.l.b16 %v651
        %v717 = vunpack.c.l.b16 %v652
        %v718 = vunpack.c.l.b16 %v653
        %v719 = vunpack.c.l.b16 %v654
        %v720 = vunpack.c.l.b16 %v655
        %v721 = vpack.c.b16 %v690, %v689
        %v722 = vpack.c.b16 %v692, %v691
        %v723 = vpack.c.b16 %v694, %v693
        %v724 = vpack.c.b16 %v696, %v695
        %v725 = vpack.c.b16 %v698, %v697
        %v726 = vpack.c.b16 %v700, %v699
        %v727 = vpack.c.b16 %v702, %v701
        %v728 = vpack.c.b16 %v704, %v703
        %v729 = vpack.c.b16 %v706, %v705
        %v730 = vpack.c.b16 %v708, %v707
        %v731 = vpack.c.b16 %v710, %v709
        %v732 = vpack.c.b16 %v712, %v711
        %v733 = vpack.c.b16 %v714, %v713
        %v734 = vpack.c.b16 %v716, %v715
        %v735 = vpack.c.b16 %v718, %v717
        %v736 = vpack.c.b16 %v720, %v719
        %753 = vmatpush.bf16.msra.mxu0 %v728
        %754 = vmatpush.bf16.msra.mxu0 %v727
        %755 = vmatpush.bf16.msra.mxu0 %v726
        %756 = vmatpush.bf16.msra.mxu0 %v725
        %757 = vmatpush.bf16.msra.mxu0 %v724
        %758 = vmatpush.bf16.msra.mxu0 %v723
        %759 = vmatpush.bf16.msra.mxu0 %v722
        %760 = vmatpush.bf16.msra.mxu0 %v721
        %761 = vmatmul.bf16.gmra.mxu0 %v622
        %v762 = vpop.f32.mrf.mxu0
        %v763 = vadd.f32 %v656, %v762
        %v764 = vpop.f32.mrf.mxu0
        %765 = vdwg.mxu0
        %766 = vmatpush.bf16.msra.mxu0 %v736
        %767 = vmatpush.bf16.msra.mxu0 %v735
        %768 = vmatpush.bf16.msra.mxu0 %v734
        %769 = vmatpush.bf16.msra.mxu0 %v733
        %770 = vmatpush.bf16.msra.mxu0 %v732
        %771 = vmatpush.bf16.msra.mxu0 %v731
        %772 = vmatpush.bf16.msra.mxu0 %v730
        %773 = vmatpush.bf16.msra.mxu0 %v729
        %774 = vmatmul.bf16.gmra.mxu0 %v623
        %v775 = vpop.f32.mrf.mxu0
        %v776 = vadd.f32 %v763, %v775
        %v777 = vpop.f32.mrf.mxu0
        %778 = vdwg.mxu0
        %v779 = vmax.f32 %v776, 0.0
        %v780 = vpack.c.bf16 %v779, %v779
        %v781 = vld [vmem:[#allocation7] sm:$0xf]
        %v782 = vld [vmem:[#allocation7 + $0x4] sm:$0xf]
        %v783 = vld [vmem:[#allocation7 + $0x8] sm:$0xf]
        %v784 = vld [vmem:[#allocation7 + $0xc] sm:$0xf]
        %v785 = vld [vmem:[#allocation7 + $0x10] sm:$0xf]
        %v786 = vld [vmem:[#allocation7 + $0x14] sm:$0xf]
        %v787 = vld [vmem:[#allocation7 + $0x18] sm:$0xf]
        %v788 = vld [vmem:[#allocation7 + $0x1c] sm:$0xf]
        %v789 = vld [vmem:[#allocation7 + $0x20] sm:$0xf]
        %v790 = vld [vmem:[#allocation7 + $0x24] sm:$0xf]
        %v791 = vld [vmem:[#allocation7 + $0x28] sm:$0xf]
        %v792 = vld [vmem:[#allocation7 + $0x2c] sm:$0xf]
        %v793 = vld [vmem:[#allocation7 + $0x30] sm:$0xf]
        %v794 = vld [vmem:[#allocation7 + $0x34] sm:$0xf]
        %v795 = vld [vmem:[#allocation7 + $0x38] sm:$0xf]
        %v796 = vld [vmem:[#allocation7 + $0x3c] sm:$0xf]
        %v797 = vld [vmem:[%s7 + $0x4] ss:$0 sm:$0xff]
        %v814 = vunpack.c.l.b16 %v781
        %v815 = vunpack.c.l.b16 %v782
        %v816 = vunpack.c.l.b16 %v783
        %v817 = vunpack.c.l.b16 %v784
        %v818 = vunpack.c.l.b16 %v785
        %v819 = vunpack.c.l.b16 %v786
        %v820 = vunpack.c.l.b16 %v787
        %v821 = vunpack.c.l.b16 %v788
        %v822 = vunpack.c.l.b16 %v789
        %v823 = vunpack.c.l.b16 %v790
        %v824 = vunpack.c.l.b16 %v791
        %v825 = vunpack.c.l.b16 %v792
        %v826 = vunpack.c.l.b16 %v793
        %v827 = vunpack.c.l.b16 %v794
        %v828 = vunpack.c.l.b16 %v795
        %v829 = vunpack.c.l.b16 %v796
        %v830 = vpack.c.b16 %v815, %v814
        %v831 = vpack.c.b16 %v817, %v816
        %v832 = vpack.c.b16 %v819, %v818
        %v833 = vpack.c.b16 %v821, %v820
        %v834 = vpack.c.b16 %v823, %v822
        %v835 = vpack.c.b16 %v825, %v824
        %v836 = vpack.c.b16 %v827, %v826
        %v837 = vpack.c.b16 %v829, %v828
        %846 = vmatpush.bf16.msra.mxu0 %v837
        %847 = vmatpush.bf16.msra.mxu0 %v836
        %848 = vmatpush.bf16.msra.mxu0 %v835
        %849 = vmatpush.bf16.msra.mxu0 %v834
        %850 = vmatpush.bf16.msra.mxu0 %v833
        %851 = vmatpush.bf16.msra.mxu0 %v832
        %852 = vmatpush.bf16.msra.mxu0 %v831
        %853 = vmatpush.bf16.msra.mxu0 %v830
        %854 = vmatmul.bf16.gmra.mxu0 %v780
        %v855 = vpop.f32.mrf.mxu0
        %v856 = vadd.f32 %v797, %v855
        %v857 = vpop.f32.mrf.mxu0
        %858 = vdwg.mxu0
        %v859 = vmax.f32 %v856, 0.0
        %v860 = vpack.c.bf16 %v859, %v859
        %v861 = vld [vmem:[#allocation9] sm:$0xf]
        %v862 = vld [vmem:[#allocation9 + $0x4] sm:$0xf]
        %v863 = vld [vmem:[#allocation9 + $0x8] sm:$0xf]
        %v864 = vld [vmem:[#allocation9 + $0xc] sm:$0xf]
        %v865 = vld [vmem:[#allocation9 + $0x10] sm:$0xf]
        %v866 = vld [vmem:[#allocation9 + $0x14] sm:$0xf]
        %v867 = vld [vmem:[#allocation9 + $0x18] sm:$0xf]
        %v868 = vld [vmem:[#allocation9 + $0x1c] sm:$0xf]
        %v869 = vld [vmem:[#allocation9 + $0x20] sm:$0xf]
        %v870 = vld [vmem:[#allocation9 + $0x24] sm:$0xf]
        %v871 = vld [vmem:[#allocation9 + $0x28] sm:$0xf]
        %v872 = vld [vmem:[#allocation9 + $0x2c] sm:$0xf]
        %v873 = vld [vmem:[#allocation9 + $0x30] sm:$0xf]
        %v874 = vld [vmem:[#allocation9 + $0x34] sm:$0xf]
        %v875 = vld [vmem:[#allocation9 + $0x38] sm:$0xf]
        %v876 = vld [vmem:[#allocation9 + $0x3c] sm:$0xf]
        %v877 = vld [vmem:[%s7 + $0x5] ss:$0 sm:$0xff]
        %v894 = vunpack.c.l.b16 %v861
        %v895 = vunpack.c.l.b16 %v862
        %v896 = vunpack.c.l.b16 %v863
        %v897 = vunpack.c.l.b16 %v864
        %v898 = vunpack.c.l.b16 %v865
        %v899 = vunpack.c.l.b16 %v866
        %v900 = vunpack.c.l.b16 %v867
        %v901 = vunpack.c.l.b16 %v868
        %v902 = vunpack.c.l.b16 %v869
        %v903 = vunpack.c.l.b16 %v870
        %v904 = vunpack.c.l.b16 %v871
        %v905 = vunpack.c.l.b16 %v872
        %v906 = vunpack.c.l.b16 %v873
        %v907 = vunpack.c.l.b16 %v874
        %v908 = vunpack.c.l.b16 %v875
        %v909 = vunpack.c.l.b16 %v876
        %v910 = vpack.c.b16 %v895, %v894
        %v911 = vpack.c.b16 %v897, %v896
        %v912 = vpack.c.b16 %v899, %v898
        %v913 = vpack.c.b16 %v901, %v900
        %v914 = vpack.c.b16 %v903, %v902
        %v915 = vpack.c.b16 %v905, %v904
        %v916 = vpack.c.b16 %v907, %v906
        %v917 = vpack.c.b16 %v909, %v908
        %926 = vmatpush.bf16.msra.mxu0 %v917
        %927 = vmatpush.bf16.msra.mxu0 %v916
        %928 = vmatpush.bf16.msra.mxu0 %v915
        %929 = vmatpush.bf16.msra.mxu0 %v914
        %930 = vmatpush.bf16.msra.mxu0 %v913
        %931 = vmatpush.bf16.msra.mxu0 %v912
        %932 = vmatpush.bf16.msra.mxu0 %v911
        %933 = vmatpush.bf16.msra.mxu0 %v910
        %934 = vmatmul.bf16.gmra.mxu0 %v860
        %v935 = vpop.f32.mrf.mxu0
        %v936 = vadd.f32 %v877, %v935
        %v937 = vpop.f32.mrf.mxu0
        %938 = vdwg.mxu0
        %939 = vst.msk [vmem:[%s383] sm:$0xff] %vm388, %v936
        %p940 = scmp.lt.s32.totalorder %s22, 1
        %s941 = scalar_select %p940, %s22, 1
        %s942 = smul.addr %s941, 8
        %s943 = scalar_lea.vmem %s8, %s942
        // Predicated region
        $region73: #{dqn_forward.1} parent=51 // pred_check
          %p944 = pneg %p213
        $region74: #{dqn_forward.1} parent=51 // pred_check_branch
          %946 = sbr.rel (%p944) target = $region76
        $region75: #{dqn_forward.1} parent=51 // pred_region
          _
        $region76: #{dqn_forward.1} parent=51 // pred_fallthru
          _
      $region52: #{dqn_forward.1} parent=5 // pred_fallthru
        _
      %p947 = scmp.le.s32.totalorder 2, %s17
      // Predicated region
      $region77: #{dqn_forward.1} parent=5 // pred_check
        %p948 = pneg %p947
      $region78: #{dqn_forward.1} parent=5 // pred_check_branch
        %950 = sbr.rel (%p948) target = $region80
      $region79: #{dqn_forward.1} parent=5 // pred_region
        %s951 = ssub.s32 %s17, 2
        // Predicated region
        $region81: #{dqn_forward.1} parent=79 // pred_check
          %p952 = pneg %p219
        $region82: #{dqn_forward.1} parent=79 // pred_check_branch
          %954 = sbr.rel (%p952) target = $region84
        $region83: #{dqn_forward.1} parent=79 // pred_region
          %p955 = scmp.lt.s32.totalorder %s23, 1
          %s956 = scalar_select %p955, %s23, 1
          %s957 = smul.addr %s956, 8
          %s958 = scalar_lea.vmem %s8, %s957
        $region84: #{dqn_forward.1} parent=79 // pred_fallthru
          _
      $region80: #{dqn_forward.1} parent=5 // pred_fallthru
        _
    $region6: #{dqn_forward.1} parent=1 // loop_footer
      %s21 = sadd.s32 1, %s17
    $region7: #{dqn_forward.1} parent=1 // loop_footer_branch
      %16 = sbr.rel target = $region3
    $region8: #{dqn_forward.1} parent=1 // loop_exit
      _
    %959 = vsyncpa [#allocation3], 1
    %s960 = scalar_lea.sflag [#allocation3], 1
    %961 = vsyncpa %s960, 1
    %962 = vsyncpa [#allocation5], 1
    %963 = vsyncpa [#allocation8], 1

</llo_original>
